<compile_context>
chip_gen: v7x
topology: tpu7x:2x2x1
jax: 0.10.0
libtpu: 0.0.40
codegen_flags: <defaults>
</compile_context>

<pallas_src>
import jax
import jax.numpy as jnp
from jax import lax
from jax.experimental import pallas as pl
from jax.experimental.pallas import tpu as pltpu

LN_EPS = 1e-5  # PyTorch nn.LayerNorm default


# ---------------------------------------------------------------------------
# Kernels
# ---------------------------------------------------------------------------
def _residual_block_kernel(x_ref, wt_ref, p_ref, o_ref):
    """Weight fully resident. x_ref: (TB, D); wt_ref: (D, D) bf16 (= W^T);
    p_ref: (3, D) f32 rows = [gamma, beta, bias]; o_ref: (TB, D)."""
    x = x_ref[...].astype(jnp.float32)
    gamma = p_ref[0:1, :]
    beta = p_ref[1:2, :]
    bias = p_ref[2:3, :]

    # LayerNorm (biased variance, eps inside rsqrt) in f32 on the VPU.
    mean = jnp.mean(x, axis=-1, keepdims=True)
    c = x - mean
    var = jnp.mean(c * c, axis=-1, keepdims=True)
    h = (c * lax.rsqrt(var + LN_EPS)) * gamma + beta
    h = jnp.maximum(h, 0.0)  # relu

    # MXU matmul: bf16 x bf16 -> f32 accumulate.
    y = jnp.dot(h.astype(wt_ref.dtype), wt_ref[...],
                preferred_element_type=jnp.float32)
    y = y + bias

    o_ref[...] = (x + y).astype(o_ref.dtype)


def _residual_block_splitn_kernel(x_ref, xcol_ref, wn_ref, lnp_ref, bcol_ref,
                                  o_ref, h_scratch):
    """Large-D path: weight streamed in (D, TN) column blocks along an
    innermost 'arbitrary' axis; LayerNorm+ReLU computed once per batch tile
    into a VMEM scratch at j == 0."""
    @pl.when(pl.program_id(1) == 0)
    def _():
        x = x_ref[...].astype(jnp.float32)
        gamma = lnp_ref[0:1, :]
        beta = lnp_ref[1:2, :]
        mean = jnp.mean(x, axis=-1, keepdims=True)
        c = x - mean
        var = jnp.mean(c * c, axis=-1, keepdims=True)
        h = (c * lax.rsqrt(var + LN_EPS)) * gamma + beta
        h_scratch[...] = jnp.maximum(h, 0.0).astype(h_scratch.dtype)

    y = jnp.dot(h_scratch[...], wn_ref[...],
                preferred_element_type=jnp.float32)
    y = y + bcol_ref[...]
    o_ref[...] = (xcol_ref[...].astype(jnp.float32) + y).astype(o_ref.dtype)


# ---------------------------------------------------------------------------
# Generation-aware sizing helpers
# ---------------------------------------------------------------------------
def _tpu_vmem_bytes():
    try:
        info = pltpu.get_tpu_info()
        for name in ("vmem_capacity_bytes", "vmem_bytes"):
            v = getattr(info, name, None)
            if v:
                return int(v)
    except Exception:
        pass
    return 64 * 1024 * 1024  # conservative default (v7x physical VMEM)


def _num_tensorcores():
    # Only v7x has 2 TensorCores per chip; best-effort string check.
    try:
        kind = jax.devices()[0].device_kind.lower()
        if "v7" in kind:
            return 2
    except Exception:
        pass
    return 1


def _divisor_tiles(B, step=8):
    cands = [t for t in range(step, B + 1, step) if B % t == 0]
    return cands if cands else [B]


def _pick_tile_b(B, fits, ncores):
    cands = [t for t in _divisor_tiles(B) if fits(t)]
    if not cands:
        cands = [min(_divisor_tiles(B))]  # best effort
    if ncores >= 2:
        # Prefer a balanced, >=2-step grid so both TensorCores get work.
        balanced = [t for t in cands if (B // t) >= 2 and (B // t) % ncores == 0]
        if balanced:
            return max(balanced)
    return max(cands)


def _pick_tile_n(D, requested=None):
    if requested is not None:
        assert D % requested == 0 and requested % 128 == 0
        return requested
    cands = [t for t in range(128, D, 128) if D % t == 0 and t <= 512]
    return max(cands) if cands else D


# ---------------------------------------------------------------------------
# Wrapper
# ---------------------------------------------------------------------------
def residual_block(x, weight, bias, gamma, beta, *, tile_b=None, tile_n=None,
                   mxu_dtype=jnp.bfloat16, out_dtype=None,
                   force_split_n=False):
    """x: (B, D); weight: (D_out, D_in) PyTorch convention; bias/gamma/beta: (D,)."""
    B, D = x.shape
    assert weight.shape == (D, D), "residual requires dim_in == dim_out"
    out_dtype = x.dtype if out_dtype is None else out_dtype

    xsz = jnp.dtype(x.dtype).itemsize
    osz = jnp.dtype(out_dtype).itemsize
    wsz = jnp.dtype(mxu_dtype).itemsize
    w_bytes = D * D * wsz

    vmem_phys = _tpu_vmem_bytes()
    vmem_limit = min((vmem_phys * 3) // 4, 112 * 1024 * 1024)
    budget = int(vmem_limit * 0.85)   # headroom for compiler temporaries
    ncores = _num_tensorcores()
    soft_cap = 16 * 1024 * 1024       # per-step x bytes soft cap

    w_t = weight.T.astype(mxu_dtype)  # (D_in, D_out) so the matmul is h @ W^T

    use_split = force_split_n or (w_bytes > budget // 3)

    if not use_split:
        # ---------------- resident-weight path ----------------
        if tile_b is None:
            def fits(tb):
                tile_x = tb * D
                vm = (w_bytes                       # resident weight (Buffered(1))
                      + 2 * tile_x * xsz            # double-buffered x
                      + 2 * tile_x * osz            # double-buffered out
                      + 4 * tile_x * 4              # f32 temporaries (x, c, h, y)
                      + 3 * D * 4)
                return vm <= budget and tile_x * xsz <= soft_cap
            tile_b = _pick_tile_b(B, fits, ncores)
        assert B % tile_b == 0

        params = jnp.stack([gamma.astype(jnp.float32),
                            beta.astype(jnp.float32),
                            bias.astype(jnp.float32)], axis=0)  # (3, D)

        cost = pl.CostEstimate(
            flops=2 * B * D * D,
            transcendentals=0,
            bytes_accessed=int(B * D * xsz + B * D * osz + w_bytes + 3 * D * 4),
        )

        return pl.pallas_call(
            _residual_block_kernel,
            out_shape=jax.ShapeDtypeStruct((B, D), out_dtype),
            grid_spec=pltpu.PrefetchScalarGridSpec(
                num_scalar_prefetch=0,
                grid=(B // tile_b,),
                in_specs=[
                    pl.BlockSpec((tile_b, D), lambda i: (i, 0)),
                    pl.BlockSpec((D, D), lambda i: (0, 0),
                                 pipeline_mode=pl.Buffered(1)),
                    pl.BlockSpec((3, D), lambda i: (0, 0),
                                 pipeline_mode=pl.Buffered(1)),
                ],
                out_specs=pl.BlockSpec((tile_b, D), lambda i: (i, 0)),
            ),
            compiler_params=pltpu.CompilerParams(
                dimension_semantics=("parallel",),
                vmem_limit_bytes=vmem_limit,
            ),
            cost_estimate=cost,
        )(x, w_t, params)

    # ---------------- N-split path (large D) ----------------
    tile_n = _pick_tile_n(D, tile_n)
    if tile_b is None:
        def fits(tb):
            vm = (2 * D * tile_n * wsz          # double-buffered weight cols
                  + 2 * tb * D * xsz            # x full row-block (LN)
                  + 2 * tb * tile_n * xsz       # x column block (residual)
                  + 2 * tb * tile_n * osz       # out column block
                  + tb * D * wsz                # h scratch
                  + 4 * tb * D * 4              # f32 temporaries
                  + 3 * D * 4)
            return vm <= budget and tb * D * xsz <= soft_cap
        tile_b = _pick_tile_b(B, fits, ncores)
    assert B % tile_b == 0 and D % tile_n == 0

    lnp = jnp.stack([gamma.astype(jnp.float32),
                     beta.astype(jnp.float32)], axis=0)      # (2, D)
    b2 = bias.reshape(1, D).astype(jnp.float32)

    cost = pl.CostEstimate(
        flops=2 * B * D * D,
        transcendentals=0,
        bytes_accessed=int(2 * B * D * xsz + B * D * osz
                           + (B // tile_b) * w_bytes + 3 * D * 4),
    )

    return pl.pallas_call(
        _residual_block_splitn_kernel,
        out_shape=jax.ShapeDtypeStruct((B, D), out_dtype),
        grid_spec=pltpu.PrefetchScalarGridSpec(
            num_scalar_prefetch=0,
            grid=(B // tile_b, D // tile_n),
            in_specs=[
                pl.BlockSpec((tile_b, D), lambda i, j: (i, 0)),       # x (LN), resident over j
                pl.BlockSpec((tile_b, tile_n), lambda i, j: (i, j)),  # x column (residual)
                pl.BlockSpec((D, tile_n), lambda i, j: (0, j)),       # weight columns
                pl.BlockSpec((2, D), lambda i, j: (0, 0),
                             pipeline_mode=pl.Buffered(1)),            # gamma/beta
                pl.BlockSpec((1, tile_n), lambda i, j: (0, j)),       # bias columns
            ],
            out_specs=pl.BlockSpec((tile_b, tile_n), lambda i, j: (i, j)),
            scratch_shapes=[pltpu.VMEM((tile_b, D), mxu_dtype)],
        ),
        compiler_params=pltpu.CompilerParams(
            dimension_semantics=("parallel", "arbitrary"),
            vmem_limit_bytes=vmem_limit,
        ),
        cost_estimate=cost,
    )(x, x, w_t, lnp, b2)


# ---------------------------------------------------------------------------
# Reference + test
# ---------------------------------------------------------------------------
def residual_block_ref(x, weight, bias, gamma, beta):
    """Pure-JAX f32 reference matching the PyTorch forward."""
    xf = x.astype(jnp.float32)
    mean = jnp.mean(xf, axis=-1, keepdims=True)
    var = jnp.mean((xf - mean) ** 2, axis=-1, keepdims=True)
    xn = (xf - mean) / jnp.sqrt(var + LN_EPS)
    h = jnp.maximum(xn * gamma + beta, 0.0)
    y = h @ weight.T + bias
    return (xf + y).astype(x.dtype)


def _make_inputs(key, B, D):
    kx, kw, kb, kg, kbe = jax.random.split(key, 5)
    x = jax.random.normal(kx, (B, D), dtype=jnp.float32)
    bound = 1.0 / (D ** 0.5)
    weight = jax.random.uniform(kw, (D, D), minval=-bound, maxval=bound,
                                dtype=jnp.float32)   # (dim_out, dim_in)
    bias = jax.random.uniform(kb, (D,), minval=-bound, maxval=bound,
                              dtype=jnp.float32)
    gamma = 1.0 + 0.1 * jax.random.normal(kg, (D,), dtype=jnp.float32)
    beta = 0.1 * jax.random.normal(kbe, (D,), dtype=jnp.float32)
    return x, weight, bias, gamma, beta


if __name__ == "__main__":
    key = jax.random.PRNGKey(0)
    k1, k2 = jax.random.split(key)

    # Path 1: resident-weight kernel (typical small-D residual MLP block).
    B, D = 256, 128
    x, w, b, g, be = _make_inputs(k1, B, D)
    out = jax.block_until_ready(residual_block(x, w, b, g, be))
    ref = residual_block_ref(x, w, b, g, be)
    assert out.shape == (B, D)
    assert jnp.allclose(out, ref, atol=3e-2, rtol=3e-2), "mismatch (resident path)"

    # Path 2: N-split kernel (forced at a small shape to exercise the large-D path).
    B2, D2 = 128, 256
    x2, w2, b2_, g2, be2 = _make_inputs(k2, B2, D2)
    out2 = jax.block_until_ready(
        residual_block(x2, w2, b2_, g2, be2, force_split_n=True, tile_n=128))
    ref2 = residual_block_ref(x2, w2, b2_, g2, be2)
    assert out2.shape == (B2, D2)
    assert jnp.allclose(out2, ref2, atol=3e-2, rtol=3e-2), "mismatch (split-N path)"

    print("KERNEL_OK")
</pallas_src>

<mosaic_0001>
module attributes {stable_mosaic.version = 11 : i64} {
  func.func @_residual_block_kernel(%arg0: i32, %arg1: memref<256x128xf32, #tpu.memory_space<vmem>>, %arg2: memref<128x128xbf16, #tpu.memory_space<vmem>>, %arg3: memref<3x128xf32, #tpu.memory_space<vmem>>, %arg4: memref<256x128xf32, #tpu.memory_space<vmem>>) attributes {dimension_semantics = [#tpu.dimension_semantics<parallel>], iteration_bounds = array<i64: 1>, scalar_prefetch = 0 : i64, scratch_operands = 0 : i64, tpu.core_type = #tpu.core_type<tc>, window_params = [{transform_indices = @transform_0, window_bounds = array<i64: 256, 128>}, {pipeline_mode = #tpu.pipeline_mode<synchronous>, transform_indices = @transform_1, window_bounds = array<i64: 128, 128>}, {pipeline_mode = #tpu.pipeline_mode<synchronous>, transform_indices = @transform_2, window_bounds = array<i64: 3, 128>}, {transform_indices = @transform_3, window_bounds = array<i64: 256, 128>}]} {
    %c0 = arith.constant 0 : index
    %c0_0 = arith.constant 0 : index
    %0 = vector.load %arg1[%c0, %c0_0] : memref<256x128xf32, #tpu.memory_space<vmem>>, vector<256x128xf32>
    %c0_1 = arith.constant 0 : index
    %c0_2 = arith.constant 0 : index
    %1 = vector.load %arg3[%c0_1, %c0_2] : memref<3x128xf32, #tpu.memory_space<vmem>>, vector<1x128xf32>
    %c1 = arith.constant 1 : index
    %c0_3 = arith.constant 0 : index
    %2 = vector.load %arg3[%c1, %c0_3] : memref<3x128xf32, #tpu.memory_space<vmem>>, vector<1x128xf32>
    %c2 = arith.constant 2 : index
    %c0_4 = arith.constant 0 : index
    %3 = vector.load %arg3[%c2, %c0_4] : memref<3x128xf32, #tpu.memory_space<vmem>>, vector<1x128xf32>
    %cst = arith.constant dense<0.000000e+00> : vector<256xf32>
    %4 = vector.multi_reduction <add>, %0, %cst [1] : vector<256x128xf32> to vector<256xf32>
    %5 = vector.shape_cast %4 : vector<256xf32> to vector<256x1xf32>
    %cst_5 = arith.constant 1.280000e+02 : f32
    %6 = vector.broadcast %cst_5 : f32 to vector<256x1xf32>
    %7 = arith.divf %5, %6 : vector<256x1xf32>
    %8 = vector.broadcast %7 : vector<256x1xf32> to vector<256x128xf32>
    %9 = arith.subf %0, %8 : vector<256x128xf32>
    %10 = arith.mulf %9, %9 : vector<256x128xf32>
    %cst_6 = arith.constant dense<0.000000e+00> : vector<256xf32>
    %11 = vector.multi_reduction <add>, %10, %cst_6 [1] : vector<256x128xf32> to vector<256xf32>
    %12 = vector.shape_cast %11 : vector<256xf32> to vector<256x1xf32>
    %cst_7 = arith.constant 1.280000e+02 : f32
    %13 = vector.broadcast %cst_7 : f32 to vector<256x1xf32>
    %14 = arith.divf %12, %13 : vector<256x1xf32>
    %cst_8 = arith.constant 9.99999974E-6 : f32
    %15 = vector.broadcast %cst_8 : f32 to vector<256x1xf32>
    %16 = arith.addf %14, %15 : vector<256x1xf32>
    %17 = math.rsqrt %16 : vector<256x1xf32>
    %18 = vector.broadcast %17 : vector<256x1xf32> to vector<256x128xf32>
    %19 = arith.mulf %9, %18 : vector<256x128xf32>
    %20 = vector.broadcast %1 : vector<1x128xf32> to vector<256x128xf32>
    %21 = arith.mulf %19, %20 : vector<256x128xf32>
    %22 = vector.broadcast %2 : vector<1x128xf32> to vector<256x128xf32>
    %23 = arith.addf %21, %22 : vector<256x128xf32>
    %cst_9 = arith.constant 0.000000e+00 : f32
    %24 = vector.broadcast %cst_9 : f32 to vector<256x128xf32>
    %25 = arith.maximumf %23, %24 : vector<256x128xf32>
    %26 = arith.truncf %25 : vector<256x128xf32> to vector<256x128xbf16>
    %c0_10 = arith.constant 0 : index
    %c0_11 = arith.constant 0 : index
    %27 = vector.load %arg2[%c0_10, %c0_11] : memref<128x128xbf16, #tpu.memory_space<vmem>>, vector<128x128xbf16>
    %cst_12 = arith.constant dense<0.000000e+00> : vector<256x128xf32>
    %28 = tpu.matmul %26, %27, %cst_12 {dimension_numbers = #tpu.dot_dimension_numbers<[1], [0], [0], [1], [0, 0, 1, 1], [], []>} : vector<256x128xbf16>, vector<128x128xbf16>, vector<256x128xf32> -> vector<256x128xf32>
    %29 = vector.broadcast %3 : vector<1x128xf32> to vector<256x128xf32>
    %30 = arith.addf %28, %29 : vector<256x128xf32>
    %31 = arith.addf %0, %30 : vector<256x128xf32>
    %c0_13 = arith.constant 0 : index
    %c0_14 = arith.constant 0 : index
    %32 = vector.load %arg4[%c0_13, %c0_14] : memref<256x128xf32, #tpu.memory_space<vmem>>, vector<256x128xf32>
    tpu.vector_store %arg4[%c0_13, %c0_14], %31 {strides = array<i32>} : memref<256x128xf32, #tpu.memory_space<vmem>>, vector<256x128xf32>,
    return
  }
  func.func @transform_0(%arg0: i32) -> (i32, i32) {
    %c0_i32 = arith.constant 0 : i32
    %c0_i32_0 = arith.constant 0 : i32
    return %arg0, %c0_i32 : i32, i32
  }
  func.func @transform_1(%arg0: i32) -> (i32, i32) {
    %c0_i32 = arith.constant 0 : i32
    %c0_i32_0 = arith.constant 0 : i32
    %c0_i32_1 = arith.constant 0 : i32
    return %c0_i32, %c0_i32_0 : i32, i32
  }
  func.func @transform_2(%arg0: i32) -> (i32, i32) {
    %c0_i32 = arith.constant 0 : i32
    %c0_i32_0 = arith.constant 0 : i32
    %c0_i32_1 = arith.constant 0 : i32
    return %c0_i32, %c0_i32_0 : i32, i32
  }
  func.func @transform_3(%arg0: i32) -> (i32, i32) {
    %c0_i32 = arith.constant 0 : i32
    %c0_i32_0 = arith.constant 0 : i32
    return %arg0, %c0_i32 : i32, i32
  }
}

</mosaic_0001>

<llo_original>
// kernel: tpu_custom_call.1
$region0: #{tpu_custom_call.1}
  #allocation0 [shape = 'u32[]', space=smem, size = 0x4, offset = 0x4, fixed_abs, tag = 'smem constant byte address 0x4 - core index']
  #allocation1 [shape = 'u32[144,128]{1,0:T(1,128)}', space=vmem, size = 0x12000, scoped, tag = 'internal scratch']
  %s0 = inlined_call_operand.hbm [shape: f32[256,128], index: 0, kind: input, shape index: {}]
  %s1 = inlined_call_operand.hbm [shape: bf16[128,128], index: 1, kind: input, shape index: {}]
  %s2 = inlined_call_operand.vmem [shape: f32[3,128], index: 2, kind: input, shape index: {}]
  %s3 = inlined_call_operand.hbm [shape: f32[256,128], index: 3, kind: output, shape index: {}]
  %s4 = sld [smem:[#allocation0]]
  $region30: #{tpu_custom_call.1} parent=0
    _
  %s6 = ssub.s32 1, %s4
  %s7 = scalar_select 0, %s6, %s4
  $region1: #{tpu_custom_call.1} parent=0
    #allocation2 [shape = 'u8[131072]{0}', space=vmem, size = 0x20000, scoped, tag = 'input window, operand 0, single buffered']
    #allocation3 [shape = 's32[1]{0}', space=sflag, size = 0x4, scoped, tag = 'scoped memory for tpu_custom_call.1']
    #allocation4 [shape = 's32[1]{0}', space=sflag, size = 0x4, scoped, tag = 'scoped memory for tpu_custom_call.1']
    #allocation5 [shape = 'u8[32768]{0}', space=vmem, size = 0x8000, scoped, tag = 'input window, operand 1, single buffered']
    #allocation6 [shape = 's32[1]{0}', space=sflag, size = 0x4, scoped, tag = 'scoped memory for tpu_custom_call.1']
    #allocation7 [shape = 'u8[131072]{0}', space=vmem, size = 0x20000, scoped, tag = 'output window, operand 0, single buffered']
    %8 = vsyncpa [#allocation3], 0
    %9 = vsyncpa [#allocation6], 0
    %10 = vsyncpa [#allocation4], 0
    // Predicated region
    $region2: #{tpu_custom_call.1} parent=1 // pred_check
      _
    $region3: #{tpu_custom_call.1} parent=1 // pred_check_branch
      %12 = sbr.rel (0) target = $region5
    $region4: #{tpu_custom_call.1} parent=1 // pred_region
      %s14 = ssub.s32 4096, 4096
      %15 = vsyncadd [#allocation3], %s14
      %s16 = sshll.u32 [#allocation2], 4
      %s17 = int_to_ptr.vmem [resolvable:$true] %s16
      %22 = dma.hbm_to_vmem [thread:$0]  %s0, 4096, %s17, [#allocation3], 128, 128, 8
    $region5: #{tpu_custom_call.1} parent=1 // pred_fallthru
      _
    // Predicated region
    $region6: #{tpu_custom_call.1} parent=1 // pred_check
      _
    $region7: #{tpu_custom_call.1} parent=1 // pred_check_branch
      %24 = sbr.rel (0) target = $region9
    $region8: #{tpu_custom_call.1} parent=1 // pred_region
      %s26 = ssub.s32 1024, 1024
      %27 = vsyncadd [#allocation6], %s26
      %s28 = sshll.u32 [#allocation5], 4
      %s29 = int_to_ptr.vmem [resolvable:$true] %s28
      %34 = dma.hbm_to_vmem [thread:$0]  %s1, 1024, %s29, [#allocation6], 64, 64, 4
    $region9: #{tpu_custom_call.1} parent=1 // pred_fallthru
      _
    // Predicated region
    $region10: #{tpu_custom_call.1} parent=1 // pred_check
      _
    $region11: #{tpu_custom_call.1} parent=1 // pred_check_branch
      %36 = sbr.rel (0) target = $region13
    $region12: #{tpu_custom_call.1} parent=1 // pred_region
      _
    $region13: #{tpu_custom_call.1} parent=1 // pred_fallthru
      _
    // Predicated region
    $region14: #{tpu_custom_call.1} parent=1 // pred_check
      _
    $region15: #{tpu_custom_call.1} parent=1 // pred_check_branch
      %38 = sbr.rel (0) target = $region17
    $region16: #{tpu_custom_call.1} parent=1 // pred_region
      %39 = dma.done [#allocation3], 4096
    $region17: #{tpu_custom_call.1} parent=1 // pred_fallthru
      _
    // Predicated region
    $region18: #{tpu_custom_call.1} parent=1 // pred_check
      _
    $region19: #{tpu_custom_call.1} parent=1 // pred_check_branch
      %41 = sbr.rel (0) target = $region21
    $region20: #{tpu_custom_call.1} parent=1 // pred_region
      %42 = dma.done [#allocation6], 1024
    $region21: #{tpu_custom_call.1} parent=1 // pred_fallthru
      _
    %v44 = vld [vmem:[#allocation2] sm:$0xff]
    %v45 = vld [vmem:[#allocation2 + $0x8] sm:$0xff]
    %v46 = vld [vmem:[#allocation2 + $0x10] sm:$0xff]
    %v47 = vld [vmem:[#allocation2 + $0x18] sm:$0xff]
    %v48 = vld [vmem:[#allocation2 + $0x20] sm:$0xff]
    %v49 = vld [vmem:[#allocation2 + $0x28] sm:$0xff]
    %v50 = vld [vmem:[#allocation2 + $0x30] sm:$0xff]
    %v51 = vld [vmem:[#allocation2 + $0x38] sm:$0xff]
    %v52 = vld [vmem:[#allocation2 + $0x40] sm:$0xff]
    %v53 = vld [vmem:[#allocation2 + $0x48] sm:$0xff]
    %v54 = vld [vmem:[#allocation2 + $0x50] sm:$0xff]
    %v55 = vld [vmem:[#allocation2 + $0x58] sm:$0xff]
    %v56 = vld [vmem:[#allocation2 + $0x60] sm:$0xff]
    %v57 = vld [vmem:[#allocation2 + $0x68] sm:$0xff]
    %v58 = vld [vmem:[#allocation2 + $0x70] sm:$0xff]
    %v59 = vld [vmem:[#allocation2 + $0x78] sm:$0xff]
    %v60 = vld [vmem:[#allocation2 + $0x80] sm:$0xff]
    %v61 = vld [vmem:[#allocation2 + $0x88] sm:$0xff]
    %v62 = vld [vmem:[#allocation2 + $0x90] sm:$0xff]
    %v63 = vld [vmem:[#allocation2 + $0x98] sm:$0xff]
    %v64 = vld [vmem:[#allocation2 + $0xa0] sm:$0xff]
    %v65 = vld [vmem:[#allocation2 + $0xa8] sm:$0xff]
    %v66 = vld [vmem:[#allocation2 + $0xb0] sm:$0xff]
    %v67 = vld [vmem:[#allocation2 + $0xb8] sm:$0xff]
    %v68 = vld [vmem:[#allocation2 + $0xc0] sm:$0xff]
    %v69 = vld [vmem:[#allocation2 + $0xc8] sm:$0xff]
    %v70 = vld [vmem:[#allocation2 + $0xd0] sm:$0xff]
    %v71 = vld [vmem:[#allocation2 + $0xd8] sm:$0xff]
    %v72 = vld [vmem:[#allocation2 + $0xe0] sm:$0xff]
    %v73 = vld [vmem:[#allocation2 + $0xe8] sm:$0xff]
    %v74 = vld [vmem:[#allocation2 + $0xf0] sm:$0xff]
    %v75 = vld [vmem:[#allocation2 + $0xf8] sm:$0xff]
    %v76 = vld [vmem:[%s2] sm:$0x1]
    %v77 = vld [vmem:[%s2 + $0x1] sm:$0x1]
    %v78 = vld [vmem:[%s2 + $0x2] sm:$0x1]
    %79 = vadd.xlane.f32.xlu0 %v44
    %v80 = vpop.xlane.xlu0 %79
    %81 = vadd.xlane.f32.xlu0 %v45
    %v82 = vpop.xlane.xlu0 %81
    %83 = vadd.xlane.f32.xlu0 %v46
    %v84 = vpop.xlane.xlu0 %83
    %85 = vadd.xlane.f32.xlu0 %v47
    %v86 = vpop.xlane.xlu0 %85
    %87 = vadd.xlane.f32.xlu0 %v48
    %v88 = vpop.xlane.xlu0 %87
    %89 = vadd.xlane.f32.xlu0 %v49
    %v90 = vpop.xlane.xlu0 %89
    %91 = vadd.xlane.f32.xlu0 %v50
    %v92 = vpop.xlane.xlu0 %91
    %93 = vadd.xlane.f32.xlu0 %v51
    %v94 = vpop.xlane.xlu0 %93
    %95 = vadd.xlane.f32.xlu0 %v52
    %v96 = vpop.xlane.xlu0 %95
    %97 = vadd.xlane.f32.xlu0 %v53
    %v98 = vpop.xlane.xlu0 %97
    %99 = vadd.xlane.f32.xlu0 %v54
    %v100 = vpop.xlane.xlu0 %99
    %101 = vadd.xlane.f32.xlu0 %v55
    %v102 = vpop.xlane.xlu0 %101
    %103 = vadd.xlane.f32.xlu0 %v56
    %v104 = vpop.xlane.xlu0 %103
    %105 = vadd.xlane.f32.xlu0 %v57
    %v106 = vpop.xlane.xlu0 %105
    %107 = vadd.xlane.f32.xlu0 %v58
    %v108 = vpop.xlane.xlu0 %107
    %109 = vadd.xlane.f32.xlu0 %v59
    %v110 = vpop.xlane.xlu0 %109
    %111 = vadd.xlane.f32.xlu0 %v60
    %v112 = vpop.xlane.xlu0 %111
    %113 = vadd.xlane.f32.xlu0 %v61
    %v114 = vpop.xlane.xlu0 %113
    %115 = vadd.xlane.f32.xlu0 %v62
    %v116 = vpop.xlane.xlu0 %115
    %117 = vadd.xlane.f32.xlu0 %v63
    %v118 = vpop.xlane.xlu0 %117
    %119 = vadd.xlane.f32.xlu0 %v64
    %v120 = vpop.xlane.xlu0 %119
    %121 = vadd.xlane.f32.xlu0 %v65
    %v122 = vpop.xlane.xlu0 %121
    %123 = vadd.xlane.f32.xlu0 %v66
    %v124 = vpop.xlane.xlu0 %123
    %125 = vadd.xlane.f32.xlu0 %v67
    %v126 = vpop.xlane.xlu0 %125
    %127 = vadd.xlane.f32.xlu0 %v68
    %v128 = vpop.xlane.xlu0 %127
    %129 = vadd.xlane.f32.xlu0 %v69
    %v130 = vpop.xlane.xlu0 %129
    %131 = vadd.xlane.f32.xlu0 %v70
    %v132 = vpop.xlane.xlu0 %131
    %133 = vadd.xlane.f32.xlu0 %v71
    %v134 = vpop.xlane.xlu0 %133
    %135 = vadd.xlane.f32.xlu0 %v72
    %v136 = vpop.xlane.xlu0 %135
    %137 = vadd.xlane.f32.xlu0 %v73
    %v138 = vpop.xlane.xlu0 %137
    %139 = vadd.xlane.f32.xlu0 %v74
    %v140 = vpop.xlane.xlu0 %139
    %141 = vadd.xlane.f32.xlu0 %v75
    %v142 = vpop.xlane.xlu0 %141
    %v143 = vrcp.pop 128.0
    %v144 = vmul.f32 %v80, %v143
    %v145 = vmul.f32 %v82, %v143
    %v146 = vmul.f32 %v84, %v143
    %v147 = vmul.f32 %v86, %v143
    %v148 = vmul.f32 %v88, %v143
    %v149 = vmul.f32 %v90, %v143
    %v150 = vmul.f32 %v92, %v143
    %v151 = vmul.f32 %v94, %v143
    %v152 = vmul.f32 %v96, %v143
    %v153 = vmul.f32 %v98, %v143
    %v154 = vmul.f32 %v100, %v143
    %v155 = vmul.f32 %v102, %v143
    %v156 = vmul.f32 %v104, %v143
    %v157 = vmul.f32 %v106, %v143
    %v158 = vmul.f32 %v108, %v143
    %v159 = vmul.f32 %v110, %v143
    %v160 = vmul.f32 %v112, %v143
    %v161 = vmul.f32 %v114, %v143
    %v162 = vmul.f32 %v116, %v143
    %v163 = vmul.f32 %v118, %v143
    %v164 = vmul.f32 %v120, %v143
    %v165 = vmul.f32 %v122, %v143
    %v166 = vmul.f32 %v124, %v143
    %v167 = vmul.f32 %v126, %v143
    %v168 = vmul.f32 %v128, %v143
    %v169 = vmul.f32 %v130, %v143
    %v170 = vmul.f32 %v132, %v143
    %v171 = vmul.f32 %v134, %v143
    %v172 = vmul.f32 %v136, %v143
    %v173 = vmul.f32 %v138, %v143
    %v174 = vmul.f32 %v140, %v143
    %v175 = vmul.f32 %v142, %v143
    %v176 = vsub.f32 %v44, %v144
    %v177 = vsub.f32 %v45, %v145
    %v178 = vsub.f32 %v46, %v146
    %v179 = vsub.f32 %v47, %v147
    %v180 = vsub.f32 %v48, %v148
    %v181 = vsub.f32 %v49, %v149
    %v182 = vsub.f32 %v50, %v150
    %v183 = vsub.f32 %v51, %v151
    %v184 = vsub.f32 %v52, %v152
    %v185 = vsub.f32 %v53, %v153
    %v186 = vsub.f32 %v54, %v154
    %v187 = vsub.f32 %v55, %v155
    %v188 = vsub.f32 %v56, %v156
    %v189 = vsub.f32 %v57, %v157
    %v190 = vsub.f32 %v58, %v158
    %v191 = vsub.f32 %v59, %v159
    %v192 = vsub.f32 %v60, %v160
    %v193 = vsub.f32 %v61, %v161
    %v194 = vsub.f32 %v62, %v162
    %v195 = vsub.f32 %v63, %v163
    %v196 = vsub.f32 %v64, %v164
    %v197 = vsub.f32 %v65, %v165
    %v198 = vsub.f32 %v66, %v166
    %v199 = vsub.f32 %v67, %v167
    %v200 = vsub.f32 %v68, %v168
    %v201 = vsub.f32 %v69, %v169
    %v202 = vsub.f32 %v70, %v170
    %v203 = vsub.f32 %v71, %v171
    %v204 = vsub.f32 %v72, %v172
    %v205 = vsub.f32 %v73, %v173
    %v206 = vsub.f32 %v74, %v174
    %v207 = vsub.f32 %v75, %v175
    %v208 = vmul.f32 %v176, %v176
    %v209 = vmul.f32 %v177, %v177
    %v210 = vmul.f32 %v178, %v178
    %v211 = vmul.f32 %v179, %v179
    %v212 = vmul.f32 %v180, %v180
    %v213 = vmul.f32 %v181, %v181
    %v214 = vmul.f32 %v182, %v182
    %v215 = vmul.f32 %v183, %v183
    %v216 = vmul.f32 %v184, %v184
    %v217 = vmul.f32 %v185, %v185
    %v218 = vmul.f32 %v186, %v186
    %v219 = vmul.f32 %v187, %v187
    %v220 = vmul.f32 %v188, %v188
    %v221 = vmul.f32 %v189, %v189
    %v222 = vmul.f32 %v190, %v190
    %v223 = vmul.f32 %v191, %v191
    %v224 = vmul.f32 %v192, %v192
    %v225 = vmul.f32 %v193, %v193
    %v226 = vmul.f32 %v194, %v194
    %v227 = vmul.f32 %v195, %v195
    %v228 = vmul.f32 %v196, %v196
    %v229 = vmul.f32 %v197, %v197
    %v230 = vmul.f32 %v198, %v198
    %v231 = vmul.f32 %v199, %v199
    %v232 = vmul.f32 %v200, %v200
    %v233 = vmul.f32 %v201, %v201
    %v234 = vmul.f32 %v202, %v202
    %v235 = vmul.f32 %v203, %v203
    %v236 = vmul.f32 %v204, %v204
    %v237 = vmul.f32 %v205, %v205
    %v238 = vmul.f32 %v206, %v206
    %v239 = vmul.f32 %v207, %v207
    %240 = vadd.xlane.f32.xlu0 %v208
    %v241 = vpop.xlane.xlu0 %240
    %242 = vadd.xlane.f32.xlu0 %v209
    %v243 = vpop.xlane.xlu0 %242
    %244 = vadd.xlane.f32.xlu0 %v210
    %v245 = vpop.xlane.xlu0 %244
    %246 = vadd.xlane.f32.xlu0 %v211
    %v247 = vpop.xlane.xlu0 %246
    %248 = vadd.xlane.f32.xlu0 %v212
    %v249 = vpop.xlane.xlu0 %248
    %250 = vadd.xlane.f32.xlu0 %v213
    %v251 = vpop.xlane.xlu0 %250
    %252 = vadd.xlane.f32.xlu0 %v214
    %v253 = vpop.xlane.xlu0 %252
    %254 = vadd.xlane.f32.xlu0 %v215
    %v255 = vpop.xlane.xlu0 %254
    %256 = vadd.xlane.f32.xlu0 %v216
    %v257 = vpop.xlane.xlu0 %256
    %258 = vadd.xlane.f32.xlu0 %v217
    %v259 = vpop.xlane.xlu0 %258
    %260 = vadd.xlane.f32.xlu0 %v218
    %v261 = vpop.xlane.xlu0 %260
    %262 = vadd.xlane.f32.xlu0 %v219
    %v263 = vpop.xlane.xlu0 %262
    %264 = vadd.xlane.f32.xlu0 %v220
    %v265 = vpop.xlane.xlu0 %264
    %266 = vadd.xlane.f32.xlu0 %v221
    %v267 = vpop.xlane.xlu0 %266
    %268 = vadd.xlane.f32.xlu0 %v222
    %v269 = vpop.xlane.xlu0 %268
    %270 = vadd.xlane.f32.xlu0 %v223
    %v271 = vpop.xlane.xlu0 %270
    %272 = vadd.xlane.f32.xlu0 %v224
    %v273 = vpop.xlane.xlu0 %272
    %274 = vadd.xlane.f32.xlu0 %v225
    %v275 = vpop.xlane.xlu0 %274
    %276 = vadd.xlane.f32.xlu0 %v226
    %v277 = vpop.xlane.xlu0 %276
    %278 = vadd.xlane.f32.xlu0 %v227
    %v279 = vpop.xlane.xlu0 %278
    %280 = vadd.xlane.f32.xlu0 %v228
    %v281 = vpop.xlane.xlu0 %280
    %282 = vadd.xlane.f32.xlu0 %v229
    %v283 = vpop.xlane.xlu0 %282
    %284 = vadd.xlane.f32.xlu0 %v230
    %v285 = vpop.xlane.xlu0 %284
    %286 = vadd.xlane.f32.xlu0 %v231
    %v287 = vpop.xlane.xlu0 %286
    %288 = vadd.xlane.f32.xlu0 %v232
    %v289 = vpop.xlane.xlu0 %288
    %290 = vadd.xlane.f32.xlu0 %v233
    %v291 = vpop.xlane.xlu0 %290
    %292 = vadd.xlane.f32.xlu0 %v234
    %v293 = vpop.xlane.xlu0 %292
    %294 = vadd.xlane.f32.xlu0 %v235
    %v295 = vpop.xlane.xlu0 %294
    %296 = vadd.xlane.f32.xlu0 %v236
    %v297 = vpop.xlane.xlu0 %296
    %298 = vadd.xlane.f32.xlu0 %v237
    %v299 = vpop.xlane.xlu0 %298
    %300 = vadd.xlane.f32.xlu0 %v238
    %v301 = vpop.xlane.xlu0 %300
    %302 = vadd.xlane.f32.xlu0 %v239
    %v303 = vpop.xlane.xlu0 %302
    %v304 = vmul.f32 %v241, %v143
    %v305 = vmul.f32 %v243, %v143
    %v306 = vmul.f32 %v245, %v143
    %v307 = vmul.f32 %v247, %v143
    %v308 = vmul.f32 %v249, %v143
    %v309 = vmul.f32 %v251, %v143
    %v310 = vmul.f32 %v253, %v143
    %v311 = vmul.f32 %v255, %v143
    %v312 = vmul.f32 %v257, %v143
    %v313 = vmul.f32 %v259, %v143
    %v314 = vmul.f32 %v261, %v143
    %v315 = vmul.f32 %v263, %v143
    %v316 = vmul.f32 %v265, %v143
    %v317 = vmul.f32 %v267, %v143
    %v318 = vmul.f32 %v269, %v143
    %v319 = vmul.f32 %v271, %v143
    %v320 = vmul.f32 %v273, %v143
    %v321 = vmul.f32 %v275, %v143
    %v322 = vmul.f32 %v277, %v143
    %v323 = vmul.f32 %v279, %v143
    %v324 = vmul.f32 %v281, %v143
    %v325 = vmul.f32 %v283, %v143
    %v326 = vmul.f32 %v285, %v143
    %v327 = vmul.f32 %v287, %v143
    %v328 = vmul.f32 %v289, %v143
    %v329 = vmul.f32 %v291, %v143
    %v330 = vmul.f32 %v293, %v143
    %v331 = vmul.f32 %v295, %v143
    %v332 = vmul.f32 %v297, %v143
    %v333 = vmul.f32 %v299, %v143
    %v334 = vmul.f32 %v301, %v143
    %v335 = vmul.f32 %v303, %v143
    %v336 = vadd.f32 %v304, 1e-05
    %v337 = vadd.f32 %v305, 1e-05
    %v338 = vadd.f32 %v306, 1e-05
    %v339 = vadd.f32 %v307, 1e-05
    %v340 = vadd.f32 %v308, 1e-05
    %v341 = vadd.f32 %v309, 1e-05
    %v342 = vadd.f32 %v310, 1e-05
    %v343 = vadd.f32 %v311, 1e-05
    %v344 = vadd.f32 %v312, 1e-05
    %v345 = vadd.f32 %v313, 1e-05
    %v346 = vadd.f32 %v314, 1e-05
    %v347 = vadd.f32 %v315, 1e-05
    %v348 = vadd.f32 %v316, 1e-05
    %v349 = vadd.f32 %v317, 1e-05
    %v350 = vadd.f32 %v318, 1e-05
    %v351 = vadd.f32 %v319, 1e-05
    %v352 = vadd.f32 %v320, 1e-05
    %v353 = vadd.f32 %v321, 1e-05
    %v354 = vadd.f32 %v322, 1e-05
    %v355 = vadd.f32 %v323, 1e-05
    %v356 = vadd.f32 %v324, 1e-05
    %v357 = vadd.f32 %v325, 1e-05
    %v358 = vadd.f32 %v326, 1e-05
    %v359 = vadd.f32 %v327, 1e-05
    %v360 = vadd.f32 %v328, 1e-05
    %v361 = vadd.f32 %v329, 1e-05
    %v362 = vadd.f32 %v330, 1e-05
    %v363 = vadd.f32 %v331, 1e-05
    %v364 = vadd.f32 %v332, 1e-05
    %v365 = vadd.f32 %v333, 1e-05
    %v366 = vadd.f32 %v334, 1e-05
    %v367 = vadd.f32 %v335, 1e-05
    %v368 = vrsqrt.pop %v336
    %v369 = vrsqrt.pop %v337
    %v370 = vrsqrt.pop %v338
    %v371 = vrsqrt.pop %v339
    %v372 = vrsqrt.pop %v340
    %v373 = vrsqrt.pop %v341
    %v374 = vrsqrt.pop %v342
    %v375 = vrsqrt.pop %v343
    %v376 = vrsqrt.pop %v344
    %v377 = vrsqrt.pop %v345
    %v378 = vrsqrt.pop %v346
    %v379 = vrsqrt.pop %v347
    %v380 = vrsqrt.pop %v348
    %v381 = vrsqrt.pop %v349
    %v382 = vrsqrt.pop %v350
    %v383 = vrsqrt.pop %v351
    %v384 = vrsqrt.pop %v352
    %v385 = vrsqrt.pop %v353
    %v386 = vrsqrt.pop %v354
    %v387 = vrsqrt.pop %v355
    %v388 = vrsqrt.pop %v356
    %v389 = vrsqrt.pop %v357
    %v390 = vrsqrt.pop %v358
    %v391 = vrsqrt.pop %v359
    %v392 = vrsqrt.pop %v360
    %v393 = vrsqrt.pop %v361
    %v394 = vrsqrt.pop %v362
    %v395 = vrsqrt.pop %v363
    %v396 = vrsqrt.pop %v364
    %v397 = vrsqrt.pop %v365
    %v398 = vrsqrt.pop %v366
    %v399 = vrsqrt.pop %v367
    %v400 = vmul.f32 %v176, %v368
    %v401 = vmul.f32 %v177, %v369
    %v402 = vmul.f32 %v178, %v370
    %v403 = vmul.f32 %v179, %v371
    %v404 = vmul.f32 %v180, %v372
    %v405 = vmul.f32 %v181, %v373
    %v406 = vmul.f32 %v182, %v374
    %v407 = vmul.f32 %v183, %v375
    %v408 = vmul.f32 %v184, %v376
    %v409 = vmul.f32 %v185, %v377
    %v410 = vmul.f32 %v186, %v378
    %v411 = vmul.f32 %v187, %v379
    %v412 = vmul.f32 %v188, %v380
    %v413 = vmul.f32 %v189, %v381
    %v414 = vmul.f32 %v190, %v382
    %v415 = vmul.f32 %v191, %v383
    %v416 = vmul.f32 %v192, %v384
    %v417 = vmul.f32 %v193, %v385
    %v418 = vmul.f32 %v194, %v386
    %v419 = vmul.f32 %v195, %v387
    %v420 = vmul.f32 %v196, %v388
    %v421 = vmul.f32 %v197, %v389
    %v422 = vmul.f32 %v198, %v390
    %v423 = vmul.f32 %v199, %v391
    %v424 = vmul.f32 %v200, %v392
    %v425 = vmul.f32 %v201, %v393
    %v426 = vmul.f32 %v202, %v394
    %v427 = vmul.f32 %v203, %v395
    %v428 = vmul.f32 %v204, %v396
    %v429 = vmul.f32 %v205, %v397
    %v430 = vmul.f32 %v206, %v398
    %v431 = vmul.f32 %v207, %v399
    %v432 = vlaneseq
    %v433 = vshrl.u32 %v432, 7
    %v434 = vsub.s32 0, %v433
    %v435 = vrot.slane %v76, %v434
    %v436 = vmul.f32 %v400, %v435
    %v437 = vmul.f32 %v401, %v435
    %v438 = vmul.f32 %v402, %v435
    %v439 = vmul.f32 %v403, %v435
    %v440 = vmul.f32 %v404, %v435
    %v441 = vmul.f32 %v405, %v435
    %v442 = vmul.f32 %v406, %v435
    %v443 = vmul.f32 %v407, %v435
    %v444 = vmul.f32 %v408, %v435
    %v445 = vmul.f32 %v409, %v435
    %v446 = vmul.f32 %v410, %v435
    %v447 = vmul.f32 %v411, %v435
    %v448 = vmul.f32 %v412, %v435
    %v449 = vmul.f32 %v413, %v435
    %v450 = vmul.f32 %v414, %v435
    %v451 = vmul.f32 %v415, %v435
    %v452 = vmul.f32 %v416, %v435
    %v453 = vmul.f32 %v417, %v435
    %v454 = vmul.f32 %v418, %v435
    %v455 = vmul.f32 %v419, %v435
    %v456 = vmul.f32 %v420, %v435
    %v457 = vmul.f32 %v421, %v435
    %v458 = vmul.f32 %v422, %v435
    %v459 = vmul.f32 %v423, %v435
    %v460 = vmul.f32 %v424, %v435
    %v461 = vmul.f32 %v425, %v435
    %v462 = vmul.f32 %v426, %v435
    %v463 = vmul.f32 %v427, %v435
    %v464 = vmul.f32 %v428, %v435
    %v465 = vmul.f32 %v429, %v435
    %v466 = vmul.f32 %v430, %v435
    %v467 = vmul.f32 %v431, %v435
    %v468 = vlaneseq
    %v469 = vshrl.u32 %v468, 7
    %v470 = vsub.s32 0, %v469
    %v471 = vrot.slane %v77, %v470
    %v472 = vadd.f32 %v436, %v471
    %v473 = vadd.f32 %v437, %v471
    %v474 = vadd.f32 %v438, %v471
    %v475 = vadd.f32 %v439, %v471
    %v476 = vadd.f32 %v440, %v471
    %v477 = vadd.f32 %v441, %v471
    %v478 = vadd.f32 %v442, %v471
    %v479 = vadd.f32 %v443, %v471
    %v480 = vadd.f32 %v444, %v471
    %v481 = vadd.f32 %v445, %v471
    %v482 = vadd.f32 %v446, %v471
    %v483 = vadd.f32 %v447, %v471
    %v484 = vadd.f32 %v448, %v471
    %v485 = vadd.f32 %v449, %v471
    %v486 = vadd.f32 %v450, %v471
    %v487 = vadd.f32 %v451, %v471
    %v488 = vadd.f32 %v452, %v471
    %v489 = vadd.f32 %v453, %v471
    %v490 = vadd.f32 %v454, %v471
    %v491 = vadd.f32 %v455, %v471
    %v492 = vadd.f32 %v456, %v471
    %v493 = vadd.f32 %v457, %v471
    %v494 = vadd.f32 %v458, %v471
    %v495 = vadd.f32 %v459, %v471
    %v496 = vadd.f32 %v460, %v471
    %v497 = vadd.f32 %v461, %v471
    %v498 = vadd.f32 %v462, %v471
    %v499 = vadd.f32 %v463, %v471
    %v500 = vadd.f32 %v464, %v471
    %v501 = vadd.f32 %v465, %v471
    %v502 = vadd.f32 %v466, %v471
    %v503 = vadd.f32 %v467, %v471
    %v504 = vmax.f32 %v472, 0.0
    %v505 = vmax.f32 %v473, 0.0
    %v506 = vmax.f32 %v474, 0.0
    %v507 = vmax.f32 %v475, 0.0
    %v508 = vmax.f32 %v476, 0.0
    %v509 = vmax.f32 %v477, 0.0
    %v510 = vmax.f32 %v478, 0.0
    %v511 = vmax.f32 %v479, 0.0
    %v512 = vmax.f32 %v480, 0.0
    %v513 = vmax.f32 %v481, 0.0
    %v514 = vmax.f32 %v482, 0.0
    %v515 = vmax.f32 %v483, 0.0
    %v516 = vmax.f32 %v484, 0.0
    %v517 = vmax.f32 %v485, 0.0
    %v518 = vmax.f32 %v486, 0.0
    %v519 = vmax.f32 %v487, 0.0
    %v520 = vmax.f32 %v488, 0.0
    %v521 = vmax.f32 %v489, 0.0
    %v522 = vmax.f32 %v490, 0.0
    %v523 = vmax.f32 %v491, 0.0
    %v524 = vmax.f32 %v492, 0.0
    %v525 = vmax.f32 %v493, 0.0
    %v526 = vmax.f32 %v494, 0.0
    %v527 = vmax.f32 %v495, 0.0
    %v528 = vmax.f32 %v496, 0.0
    %v529 = vmax.f32 %v497, 0.0
    %v530 = vmax.f32 %v498, 0.0
    %v531 = vmax.f32 %v499, 0.0
    %v532 = vmax.f32 %v500, 0.0
    %v533 = vmax.f32 %v501, 0.0
    %v534 = vmax.f32 %v502, 0.0
    %v535 = vmax.f32 %v503, 0.0
    %v536 = vpack.c.bf16 %v505, %v504
    %v537 = vpack.c.bf16 %v507, %v506
    %v538 = vpack.c.bf16 %v509, %v508
    %v539 = vpack.c.bf16 %v511, %v510
    %v540 = vpack.c.bf16 %v513, %v512
    %v541 = vpack.c.bf16 %v515, %v514
    %v542 = vpack.c.bf16 %v517, %v516
    %v543 = vpack.c.bf16 %v519, %v518
    %v544 = vpack.c.bf16 %v521, %v520
    %v545 = vpack.c.bf16 %v523, %v522
    %v546 = vpack.c.bf16 %v525, %v524
    %v547 = vpack.c.bf16 %v527, %v526
    %v548 = vpack.c.bf16 %v529, %v528
    %v549 = vpack.c.bf16 %v531, %v530
    %v550 = vpack.c.bf16 %v533, %v532
    %v551 = vpack.c.bf16 %v535, %v534
    %v552 = vld [vmem:[#allocation5] sm:$0xf]
    %v553 = vld [vmem:[#allocation5 + $0x4] sm:$0xf]
    %v554 = vld [vmem:[#allocation5 + $0x8] sm:$0xf]
    %v555 = vld [vmem:[#allocation5 + $0xc] sm:$0xf]
    %v556 = vld [vmem:[#allocation5 + $0x10] sm:$0xf]
    %v557 = vld [vmem:[#allocation5 + $0x14] sm:$0xf]
    %v558 = vld [vmem:[#allocation5 + $0x18] sm:$0xf]
    %v559 = vld [vmem:[#allocation5 + $0x1c] sm:$0xf]
    %v560 = vld [vmem:[#allocation5 + $0x20] sm:$0xf]
    %v561 = vld [vmem:[#allocation5 + $0x24] sm:$0xf]
    %v562 = vld [vmem:[#allocation5 + $0x28] sm:$0xf]
    %v563 = vld [vmem:[#allocation5 + $0x2c] sm:$0xf]
    %v564 = vld [vmem:[#allocation5 + $0x30] sm:$0xf]
    %v565 = vld [vmem:[#allocation5 + $0x34] sm:$0xf]
    %v566 = vld [vmem:[#allocation5 + $0x38] sm:$0xf]
    %v567 = vld [vmem:[#allocation5 + $0x3c] sm:$0xf]
    %v568 = vlaneseq
    %v569 = vshrl.u32 %v568, 7
    %v570 = vsub.s32 0, %v569
    %v571 = vrot.slane %v78, %v570
    %v588 = vunpack.c.l.b16 %v552
    %v589 = vunpack.c.l.b16 %v553
    %v590 = vunpack.c.l.b16 %v554
    %v591 = vunpack.c.l.b16 %v555
    %v592 = vunpack.c.l.b16 %v556
    %v593 = vunpack.c.l.b16 %v557
    %v594 = vunpack.c.l.b16 %v558
    %v595 = vunpack.c.l.b16 %v559
    %v596 = vunpack.c.l.b16 %v560
    %v597 = vunpack.c.l.b16 %v561
    %v598 = vunpack.c.l.b16 %v562
    %v599 = vunpack.c.l.b16 %v563
    %v600 = vunpack.c.l.b16 %v564
    %v601 = vunpack.c.l.b16 %v565
    %v602 = vunpack.c.l.b16 %v566
    %v603 = vunpack.c.l.b16 %v567
    %v604 = vpack.c.b16 %v589, %v588
    %v605 = vpack.c.b16 %v591, %v590
    %v606 = vpack.c.b16 %v593, %v592
    %v607 = vpack.c.b16 %v595, %v594
    %v608 = vpack.c.b16 %v597, %v596
    %v609 = vpack.c.b16 %v599, %v598
    %v610 = vpack.c.b16 %v601, %v600
    %v611 = vpack.c.b16 %v603, %v602
    %620 = vmatprep.subr.bf16.mxu0 0
    %621 = vmatpush1.bf16.msra.mxu0 %v604
    %622 = vmatprep.subr.bf16.mxu0 0
    %623 = vmatpush1.bf16.msra.mxu0 %v605
    %624 = vmatprep.subr.bf16.mxu0 0
    %625 = vmatpush1.bf16.msra.mxu0 %v606
    %626 = vmatprep.subr.bf16.mxu0 0
    %627 = vmatpush1.bf16.msra.mxu0 %v607
    %628 = vmatprep.subr.bf16.mxu0 0
    %629 = vmatpush1.bf16.msra.mxu0 %v608
    %630 = vmatprep.subr.bf16.mxu0 0
    %631 = vmatpush1.bf16.msra.mxu0 %v609
    %632 = vmatprep.subr.bf16.mxu0 0
    %633 = vmatpush1.bf16.msra.mxu0 %v610
    %634 = vmatprep.subr.bf16.mxu0 0
    %635 = vmatpush1.bf16.msra.mxu0 %v611
    %636 = vmatprep.subr.bf16.mxu0 0
    %637 = vmatpush1.bf16.msra.mxu0 0
    %638 = vmatprep.subr.bf16.mxu0 0
    %639 = vmatpush1.bf16.msra.mxu0 0
    %640 = vmatprep.subr.bf16.mxu0 0
    %641 = vmatpush1.bf16.msra.mxu0 0
    %642 = vmatprep.subr.bf16.mxu0 0
    %643 = vmatpush1.bf16.msra.mxu0 0
    %644 = vmatprep.subr.bf16.mxu0 0
    %645 = vmatpush1.bf16.msra.mxu0 0
    %646 = vmatprep.subr.bf16.mxu0 0
    %647 = vmatpush1.bf16.msra.mxu0 0
    %648 = vmatprep.subr.bf16.mxu0 0
    %649 = vmatpush1.bf16.msra.mxu0 0
    %650 = vmatprep.subr.bf16.mxu0 0
    %651 = vmatpush1.bf16.msra.mxu0 0
    %652 = vmatprep.mubr.bf16.mxu0 0
    %653 = vmatmul.mubr.bf16.gmra.mrb[0].mxu0 %v536
    %v654 = vpop.f32.mrb[0].mxu0
    %v655 = vadd.f32 %v571, %v654
    %v656 = vpop.f32.mrb[0].mxu0
    %v657 = vpop.f32.mrb[0].mxu0
    %v658 = vadd.f32 %v571, %v657
    %v659 = vpop.f32.mrb[0].mxu0
    %660 = vmatprep.mubr.bf16.mxu0 0
    %661 = vmatmul.mubr.bf16.gmra.mrb[0].mxu0 %v537
    %v662 = vpop.f32.mrb[0].mxu0
    %v663 = vadd.f32 %v571, %v662
    %v664 = vpop.f32.mrb[0].mxu0
    %v665 = vpop.f32.mrb[0].mxu0
    %v666 = vadd.f32 %v571, %v665
    %v667 = vpop.f32.mrb[0].mxu0
    %668 = vmatprep.mubr.bf16.mxu0 0
    %669 = vmatmul.mubr.bf16.gmra.mrb[0].mxu0 %v538
    %v670 = vpop.f32.mrb[0].mxu0
    %v671 = vadd.f32 %v571, %v670
    %v672 = vpop.f32.mrb[0].mxu0
    %v673 = vpop.f32.mrb[0].mxu0
    %v674 = vadd.f32 %v571, %v673
    %v675 = vpop.f32.mrb[0].mxu0
    %676 = vmatprep.mubr.bf16.mxu0 0
    %677 = vmatmul.mubr.bf16.gmra.mrb[0].mxu0 %v539
    %v678 = vpop.f32.mrb[0].mxu0
    %v679 = vadd.f32 %v571, %v678
    %v680 = vpop.f32.mrb[0].mxu0
    %v681 = vpop.f32.mrb[0].mxu0
    %v682 = vadd.f32 %v571, %v681
    %v683 = vpop.f32.mrb[0].mxu0
    %684 = vmatprep.mubr.bf16.mxu0 0
    %685 = vmatmul.mubr.bf16.gmra.mrb[0].mxu0 %v540
    %v686 = vpop.f32.mrb[0].mxu0
    %v687 = vadd.f32 %v571, %v686
    %v688 = vpop.f32.mrb[0].mxu0
    %v689 = vpop.f32.mrb[0].mxu0
    %v690 = vadd.f32 %v571, %v689
    %v691 = vpop.f32.mrb[0].mxu0
    %692 = vmatprep.mubr.bf16.mxu0 0
    %693 = vmatmul.mubr.bf16.gmra.mrb[0].mxu0 %v541
    %v694 = vpop.f32.mrb[0].mxu0
    %v695 = vadd.f32 %v571, %v694
    %v696 = vpop.f32.mrb[0].mxu0
    %v697 = vpop.f32.mrb[0].mxu0
    %v698 = vadd.f32 %v571, %v697
    %v699 = vpop.f32.mrb[0].mxu0
    %700 = vmatprep.mubr.bf16.mxu0 0
    %701 = vmatmul.mubr.bf16.gmra.mrb[0].mxu0 %v542
    %v702 = vpop.f32.mrb[0].mxu0
    %v703 = vadd.f32 %v571, %v702
    %v704 = vpop.f32.mrb[0].mxu0
    %v705 = vpop.f32.mrb[0].mxu0
    %v706 = vadd.f32 %v571, %v705
    %v707 = vpop.f32.mrb[0].mxu0
    %708 = vmatprep.mubr.bf16.mxu0 0
    %709 = vmatmul.mubr.bf16.gmra.mrb[0].mxu0 %v543
    %v710 = vpop.f32.mrb[0].mxu0
    %v711 = vadd.f32 %v571, %v710
    %v712 = vpop.f32.mrb[0].mxu0
    %v713 = vpop.f32.mrb[0].mxu0
    %v714 = vadd.f32 %v571, %v713
    %v715 = vpop.f32.mrb[0].mxu0
    %716 = vmatprep.mubr.bf16.mxu0 0
    %717 = vmatmul.mubr.bf16.gmra.mrb[0].mxu0 %v544
    %v718 = vpop.f32.mrb[0].mxu0
    %v719 = vadd.f32 %v571, %v718
    %v720 = vpop.f32.mrb[0].mxu0
    %v721 = vpop.f32.mrb[0].mxu0
    %v722 = vadd.f32 %v571, %v721
    %v723 = vpop.f32.mrb[0].mxu0
    %724 = vmatprep.mubr.bf16.mxu0 0
    %725 = vmatmul.mubr.bf16.gmra.mrb[0].mxu0 %v545
    %v726 = vpop.f32.mrb[0].mxu0
    %v727 = vadd.f32 %v571, %v726
    %v728 = vpop.f32.mrb[0].mxu0
    %v729 = vpop.f32.mrb[0].mxu0
    %v730 = vadd.f32 %v571, %v729
    %v731 = vpop.f32.mrb[0].mxu0
    %732 = vmatprep.mubr.bf16.mxu0 0
    %733 = vmatmul.mubr.bf16.gmra.mrb[0].mxu0 %v546
    %v734 = vpop.f32.mrb[0].mxu0
    %v735 = vadd.f32 %v571, %v734
    %v736 = vpop.f32.mrb[0].mxu0
    %v737 = vpop.f32.mrb[0].mxu0
    %v738 = vadd.f32 %v571, %v737
    %v739 = vpop.f32.mrb[0].mxu0
    %740 = vmatprep.mubr.bf16.mxu0 0
    %741 = vmatmul.mubr.bf16.gmra.mrb[0].mxu0 %v547
    %v742 = vpop.f32.mrb[0].mxu0
    %v743 = vadd.f32 %v571, %v742
    %v744 = vpop.f32.mrb[0].mxu0
    %v745 = vpop.f32.mrb[0].mxu0
    %v746 = vadd.f32 %v571, %v745
    %v747 = vpop.f32.mrb[0].mxu0
    %748 = vmatprep.mubr.bf16.mxu0 0
    %749 = vmatmul.mubr.bf16.gmra.mrb[0].mxu0 %v548
    %v750 = vpop.f32.mrb[0].mxu0
    %v751 = vadd.f32 %v571, %v750
    %v752 = vpop.f32.mrb[0].mxu0
    %v753 = vpop.f32.mrb[0].mxu0
    %v754 = vadd.f32 %v571, %v753
    %v755 = vpop.f32.mrb[0].mxu0
    %756 = vmatprep.mubr.bf16.mxu0 0
    %757 = vmatmul.mubr.bf16.gmra.mrb[0].mxu0 %v549
    %v758 = vpop.f32.mrb[0].mxu0
    %v759 = vadd.f32 %v571, %v758
    %v760 = vpop.f32.mrb[0].mxu0
    %v761 = vpop.f32.mrb[0].mxu0
    %v762 = vadd.f32 %v571, %v761
    %v763 = vpop.f32.mrb[0].mxu0
    %764 = vmatprep.mubr.bf16.mxu0 0
    %765 = vmatmul.mubr.bf16.gmra.mrb[0].mxu0 %v550
    %v766 = vpop.f32.mrb[0].mxu0
    %v767 = vadd.f32 %v571, %v766
    %v768 = vpop.f32.mrb[0].mxu0
    %v769 = vpop.f32.mrb[0].mxu0
    %v770 = vadd.f32 %v571, %v769
    %v771 = vpop.f32.mrb[0].mxu0
    %772 = vmatprep.mubr.bf16.mxu0 0
    %773 = vmatmul.mubr.bf16.gmra.mrb[0].mxu0 %v551
    %v774 = vpop.f32.mrb[0].mxu0
    %v775 = vadd.f32 %v571, %v774
    %v776 = vpop.f32.mrb[0].mxu0
    %v777 = vpop.f32.mrb[0].mxu0
    %v778 = vadd.f32 %v571, %v777
    %v779 = vpop.f32.mrb[0].mxu0
    %780 = vdwg.mxu0
    %v781 = vadd.f32 %v44, %v655
    %v782 = vadd.f32 %v45, %v658
    %v783 = vadd.f32 %v46, %v663
    %v784 = vadd.f32 %v47, %v666
    %v785 = vadd.f32 %v48, %v671
    %v786 = vadd.f32 %v49, %v674
    %v787 = vadd.f32 %v50, %v679
    %v788 = vadd.f32 %v51, %v682
    %v789 = vadd.f32 %v52, %v687
    %v790 = vadd.f32 %v53, %v690
    %v791 = vadd.f32 %v54, %v695
    %v792 = vadd.f32 %v55, %v698
    %v793 = vadd.f32 %v56, %v703
    %v794 = vadd.f32 %v57, %v706
    %v795 = vadd.f32 %v58, %v711
    %v796 = vadd.f32 %v59, %v714
    %v797 = vadd.f32 %v60, %v719
    %v798 = vadd.f32 %v61, %v722
    %v799 = vadd.f32 %v62, %v727
    %v800 = vadd.f32 %v63, %v730
    %v801 = vadd.f32 %v64, %v735
    %v802 = vadd.f32 %v65, %v738
    %v803 = vadd.f32 %v66, %v743
    %v804 = vadd.f32 %v67, %v746
    %v805 = vadd.f32 %v68, %v751
    %v806 = vadd.f32 %v69, %v754
    %v807 = vadd.f32 %v70, %v759
    %v808 = vadd.f32 %v71, %v762
    %v809 = vadd.f32 %v72, %v767
    %v810 = vadd.f32 %v73, %v770
    %v811 = vadd.f32 %v74, %v775
    %v812 = vadd.f32 %v75, %v778
    %813 = vst [vmem:[#allocation7] sm:$0xff] %v781
    %814 = vst [vmem:[#allocation7 + $0x8] sm:$0xff] %v782
    %815 = vst [vmem:[#allocation7 + $0x10] sm:$0xff] %v783
    %816 = vst [vmem:[#allocation7 + $0x18] sm:$0xff] %v784
    %817 = vst [vmem:[#allocation7 + $0x20] sm:$0xff] %v785
    %818 = vst [vmem:[#allocation7 + $0x28] sm:$0xff] %v786
    %819 = vst [vmem:[#allocation7 + $0x30] sm:$0xff] %v787
    %820 = vst [vmem:[#allocation7 + $0x38] sm:$0xff] %v788
    %821 = vst [vmem:[#allocation7 + $0x40] sm:$0xff] %v789
    %822 = vst [vmem:[#allocation7 + $0x48] sm:$0xff] %v790
    %823 = vst [vmem:[#allocation7 + $0x50] sm:$0xff] %v791
    %824 = vst [vmem:[#allocation7 + $0x58] sm:$0xff] %v792
    %825 = vst [vmem:[#allocation7 + $0x60] sm:$0xff] %v793
    %826 = vst [vmem:[#allocation7 + $0x68] sm:$0xff] %v794
    %827 = vst [vmem:[#allocation7 + $0x70] sm:$0xff] %v795
    %828 = vst [vmem:[#allocation7 + $0x78] sm:$0xff] %v796
    %829 = vst [vmem:[#allocation7 + $0x80] sm:$0xff] %v797
    %830 = vst [vmem:[#allocation7 + $0x88] sm:$0xff] %v798
    %831 = vst [vmem:[#allocation7 + $0x90] sm:$0xff] %v799
    %832 = vst [vmem:[#allocation7 + $0x98] sm:$0xff] %v800
    %833 = vst [vmem:[#allocation7 + $0xa0] sm:$0xff] %v801
    %834 = vst [vmem:[#allocation7 + $0xa8] sm:$0xff] %v802
    %835 = vst [vmem:[#allocation7 + $0xb0] sm:$0xff] %v803
    %836 = vst [vmem:[#allocation7 + $0xb8] sm:$0xff] %v804
    %837 = vst [vmem:[#allocation7 + $0xc0] sm:$0xff] %v805
    %838 = vst [vmem:[#allocation7 + $0xc8] sm:$0xff] %v806
    %839 = vst [vmem:[#allocation7 + $0xd0] sm:$0xff] %v807
    %840 = vst [vmem:[#allocation7 + $0xd8] sm:$0xff] %v808
    %841 = vst [vmem:[#allocation7 + $0xe0] sm:$0xff] %v809
    %842 = vst [vmem:[#allocation7 + $0xe8] sm:$0xff] %v810
    %843 = vst [vmem:[#allocation7 + $0xf0] sm:$0xff] %v811
    %844 = vst [vmem:[#allocation7 + $0xf8] sm:$0xff] %v812
    // Predicated region
    $region22: #{tpu_custom_call.1} parent=1 // pred_check
      _
    $region23: #{tpu_custom_call.1} parent=1 // pred_check_branch
      %846 = sbr.rel (0) target = $region25
    $region24: #{tpu_custom_call.1} parent=1 // pred_region
      %s848 = ssub.s32 4096, 4096
      %849 = vsyncadd [#allocation4], %s848
      %s850 = sshll.u32 [#allocation7], 4
      %s851 = int_to_ptr.vmem [resolvable:$true] %s850
      %856 = dma.vmem_to_hbm [thread:$0]  %s851, 4096, %s3, [#allocation4], 128, 128, 8
    $region25: #{tpu_custom_call.1} parent=1 // pred_fallthru
      _
    // Predicated region
    $region26: #{tpu_custom_call.1} parent=1 // pred_check
      _
    $region27: #{tpu_custom_call.1} parent=1 // pred_check_branch
      %858 = sbr.rel (0) target = $region29
    $region28: #{tpu_custom_call.1} parent=1 // pred_region
      %859 = dma.done [#allocation4], 4096
    $region29: #{tpu_custom_call.1} parent=1 // pred_fallthru
      _
    %860 = vsyncpa [#allocation3], 1
    %861 = vsyncpa [#allocation6], 1
    %862 = vsyncpa [#allocation4], 1

</llo_original>
